<compile_context>
chip_gen: v6e
topology: v6e:2x2x1
jax: 0.10.0
libtpu: 0.0.40
codegen_flags: <defaults>
</compile_context>

<pallas_src>
import jax
import jax.numpy as jnp
from jax.experimental import pallas as pl
from jax.experimental.pallas import tpu as pltpu


def _round_up(x, m):
    return ((x + m - 1) // m) * m


def actor_critic_kernel(x_ref, w1_ref, b1_ref, w2_ref, b2_ref, wh_ref, bh_ref,
                        negm_ref, selm_ref, out_ref):
    # fc1 + ReLU   (bf16 x / bf16 w1, f32 accumulate + f32 bias)
    h1 = jnp.dot(x_ref[...], w1_ref[...],
                 preferred_element_type=jnp.float32) + b1_ref[...]
    h1 = jnp.maximum(h1, 0.0)

    # fc2 + ReLU
    h2 = jnp.dot(h1.astype(jnp.bfloat16), w2_ref[...],
                 preferred_element_type=jnp.float32) + b2_ref[...]
    h2 = jnp.maximum(h2, 0.0)

    # Fused actor|critic head: one [TB, 128] MXU pass.
    #   cols [0, A)   -> actor logits
    #   col  A        -> critic value
    #   cols (A, 128) -> exactly zero (zero-padded weights & bias)
    z = jnp.dot(h2.astype(jnp.bfloat16), wh_ref[...],
                preferred_element_type=jnp.float32) + bh_ref[...]

    # Numerically-stable softmax over the real actor columns only.
    # negm is 0.0 on actor columns, -1e30 elsewhere (precomputed, resident).
    logits = z + negm_ref[...]
    m = jnp.max(logits, axis=-1, keepdims=True)
    e = jnp.exp(logits - m)                       # masked cols underflow to 0
    s = jnp.sum(e, axis=-1, keepdims=True)
    probs = e * pl.reciprocal(s, approx=True)     # EUP slot, not VPU divide

    # selm is 1.0 only at the critic column; padding columns of z are exactly 0.
    out_ref[...] = (probs + z * selm_ref[...]).astype(out_ref.dtype)


def prepare_params(params):
    """One-time packing / casting of parameters (do NOT call per forward step).

    params: (w1, b1, w2, b2, wa, ba, wc, bc) with weights stored [in, out]
    (transposed vs. torch) and biases of shape [out].
    """
    w1, b1, w2, b2, wa, ba, wc, bc = params
    in_dim, H = w1.shape
    A = wa.shape[1]
    HEAD = _round_up(A + 1, 128)                  # lane-dense fused head width

    # Fuse actor|critic into one padded head weight / bias (zeros in padding).
    wh = jnp.zeros((H, HEAD), jnp.float32)
    wh = wh.at[:, :A].set(wa).at[:, A:A + 1].set(wc)
    bh = jnp.zeros((1, HEAD), jnp.float32)
    bh = bh.at[:, :A].set(ba.reshape(1, -1)).at[:, A:A + 1].set(bc.reshape(1, -1))

    # Precomputed column masks (hoisted out of the kernel epilogue).
    col = jnp.arange(HEAD)
    neg_mask = jnp.where(col < A, 0.0, -1e30).reshape(1, HEAD).astype(jnp.float32)
    sel_mask = (col == A).astype(jnp.float32).reshape(1, HEAD)

    return {
        "w1": w1.astype(jnp.bfloat16),
        "b1": b1.reshape(1, -1).astype(jnp.float32),
        "w2": w2.astype(jnp.bfloat16),
        "b2": b2.reshape(1, -1).astype(jnp.float32),
        "wh": wh.astype(jnp.bfloat16),
        "bh": bh,
        "neg_mask": neg_mask,
        "sel_mask": sel_mask,
        "in_dim": in_dim,
        "hidden": H,
        "action_dim": A,
        "head": HEAD,
    }


def actor_critic_forward(x, prepared, *, batch_tile=512):
    """x: [B, input_dim] float. prepared: output of prepare_params().
    Returns (action_probs [B, A], state_value [B, 1]), both float32."""
    B = x.shape[0]
    in_dim = prepared["in_dim"]
    H = prepared["hidden"]
    A = prepared["action_dim"]
    HEAD = prepared["head"]

    x = x.astype(jnp.bfloat16)

    # Batch tile: multiple of 8, large for HBM roofline, but capped so the grid
    # has >= 2 steps whenever B >= 16 (keeps both v7x TensorCores busy).
    TB = _round_up(max(batch_tile, 8), 8)
    if B >= 16:
        TB = min(TB, _round_up((B + 1) // 2, 8))
    TB = min(TB, _round_up(B, 8))
    grid = (pl.cdiv(B, TB),)                      # ragged last tile handled by Pallas

    resident = lambda shape: pl.BlockSpec(shape, lambda i: (0, 0))

    out = pl.pallas_call(
        actor_critic_kernel,
        out_shape=jax.ShapeDtypeStruct((B, HEAD), jnp.float32),
        grid=grid,
        in_specs=[
            pl.BlockSpec((TB, in_dim), lambda i: (i, 0)),   # x: tiled over batch
            resident((in_dim, H)), resident((1, H)),        # w1 (bf16), b1 (f32)
            resident((H, H)), resident((1, H)),             # w2 (bf16), b2 (f32)
            resident((H, HEAD)), resident((1, HEAD)),       # fused head W (bf16), b
            resident((1, HEAD)), resident((1, HEAD)),       # neg_mask, sel_mask
        ],
        out_specs=pl.BlockSpec((TB, HEAD), lambda i: (i, 0)),
        compiler_params=pltpu.CompilerParams(
            dimension_semantics=("parallel",)),
    )(x, prepared["w1"], prepared["b1"], prepared["w2"], prepared["b2"],
      prepared["wh"], prepared["bh"], prepared["neg_mask"], prepared["sel_mask"])

    probs = out[:, :A]
    value = out[:, A:A + 1]
    return probs, value


def init_params(key, input_dim, action_dim, hidden=128):
    """Deterministic init mimicking PyTorch Linear (uniform +-1/sqrt(fan_in)).
    Weights stored as [in, out] (transposed vs torch's [out, in])."""
    def linear(k, fan_in, fan_out):
        kw, kb = jax.random.split(k)
        bound = 1.0 / jnp.sqrt(fan_in)
        w = jax.random.uniform(kw, (fan_in, fan_out), jnp.float32, -bound, bound)
        b = jax.random.uniform(kb, (fan_out,), jnp.float32, -bound, bound)
        return w, b

    k1, k2, k3, k4 = jax.random.split(key, 4)
    w1, b1 = linear(k1, input_dim, hidden)
    w2, b2 = linear(k2, hidden, hidden)
    wa, ba = linear(k3, hidden, action_dim)
    wc, bc = linear(k4, hidden, 1)
    return (w1, b1, w2, b2, wa, ba, wc, bc)


if __name__ == "__main__":
    key = jax.random.PRNGKey(0)
    k_params, k_x = jax.random.split(key)

    input_dim = 16
    action_dim = 4
    batch = 8

    params = init_params(k_params, input_dim, action_dim)
    prepared = prepare_params(params)                 # one-time packing / bf16 cast
    x = jax.random.normal(k_x, (batch, input_dim), jnp.float32)

    probs, value = actor_critic_forward(x, prepared)
    jax.block_until_ready((probs, value))

    # Sanity check against a pure-JAX reference using the same bf16 weight casts
    # (f32 accumulation), so the only expected deltas are MXU accumulation order
    # and the approximate reciprocal in the softmax.
    w1, b1, w2, b2, wa, ba, wc, bc = params
    bf = jnp.bfloat16
    h = jnp.maximum(
        jnp.dot(x.astype(bf), w1.astype(bf), preferred_element_type=jnp.float32)
        + b1.reshape(1, -1), 0.0)
    h = jnp.maximum(
        jnp.dot(h.astype(bf), w2.astype(bf), preferred_element_type=jnp.float32)
        + b2.reshape(1, -1), 0.0)
    ref_logits = (jnp.dot(h.astype(bf), wa.astype(bf),
                          preferred_element_type=jnp.float32) + ba.reshape(1, -1))
    ref_probs = jax.nn.softmax(ref_logits, axis=-1)
    ref_value = (jnp.dot(h.astype(bf), wc.astype(bf),
                         preferred_element_type=jnp.float32) + bc.reshape(1, -1))

    assert probs.shape == (batch, action_dim) and value.shape == (batch, 1)
    assert jnp.allclose(probs, ref_probs, atol=5e-3)
    assert jnp.allclose(value, ref_value, atol=5e-3)
    assert jnp.allclose(jnp.sum(probs, axis=-1), 1.0, atol=5e-3)

    print("KERNEL_OK")
</pallas_src>

<mosaic_0001>
module attributes {stable_mosaic.version = 11 : i64} {
  func.func @actor_critic_kernel(%arg0: i32, %arg1: memref<8x16xbf16, #tpu.memory_space<vmem>>, %arg2: memref<16x128xbf16, #tpu.memory_space<vmem>>, %arg3: memref<1x128xf32, #tpu.memory_space<vmem>>, %arg4: memref<128x128xbf16, #tpu.memory_space<vmem>>, %arg5: memref<1x128xf32, #tpu.memory_space<vmem>>, %arg6: memref<128x128xbf16, #tpu.memory_space<vmem>>, %arg7: memref<1x128xf32, #tpu.memory_space<vmem>>, %arg8: memref<1x128xf32, #tpu.memory_space<vmem>>, %arg9: memref<1x128xf32, #tpu.memory_space<vmem>>, %arg10: memref<8x128xf32, #tpu.memory_space<vmem>>) attributes {dimension_semantics = [#tpu.dimension_semantics<parallel>], iteration_bounds = array<i64: 1>, scalar_prefetch = 0 : i64, scratch_operands = 0 : i64, tpu.core_type = #tpu.core_type<tc>, window_params = [{transform_indices = @transform_0, window_bounds = array<i64: 8, 16>}, {pipeline_mode = #tpu.pipeline_mode<synchronous>, transform_indices = @transform_1, window_bounds = array<i64: 16, 128>}, {pipeline_mode = #tpu.pipeline_mode<synchronous>, transform_indices = @transform_2, window_bounds = array<i64: 1, 128>}, {pipeline_mode = #tpu.pipeline_mode<synchronous>, transform_indices = @transform_3, window_bounds = array<i64: 128, 128>}, {pipeline_mode = #tpu.pipeline_mode<synchronous>, transform_indices = @transform_4, window_bounds = array<i64: 1, 128>}, {pipeline_mode = #tpu.pipeline_mode<synchronous>, transform_indices = @transform_5, window_bounds = array<i64: 128, 128>}, {pipeline_mode = #tpu.pipeline_mode<synchronous>, transform_indices = @transform_6, window_bounds = array<i64: 1, 128>}, {pipeline_mode = #tpu.pipeline_mode<synchronous>, transform_indices = @transform_7, window_bounds = array<i64: 1, 128>}, {pipeline_mode = #tpu.pipeline_mode<synchronous>, transform_indices = @transform_8, window_bounds = array<i64: 1, 128>}, {transform_indices = @transform_9, window_bounds = array<i64: 8, 128>}]} {
    %c0 = arith.constant 0 : index
    %c0_0 = arith.constant 0 : index
    %0 = vector.load %arg1[%c0, %c0_0] : memref<8x16xbf16, #tpu.memory_space<vmem>>, vector<8x16xbf16>
    %c0_1 = arith.constant 0 : index
    %c0_2 = arith.constant 0 : index
    %1 = vector.load %arg2[%c0_1, %c0_2] : memref<16x128xbf16, #tpu.memory_space<vmem>>, vector<16x128xbf16>
    %cst = arith.constant dense<0.000000e+00> : vector<8x128xf32>
    %2 = tpu.matmul %0, %1, %cst {dimension_numbers = #tpu.dot_dimension_numbers<[1], [0], [0], [1], [0, 0, 1, 1], [], []>} : vector<8x16xbf16>, vector<16x128xbf16>, vector<8x128xf32> -> vector<8x128xf32>
    %c0_3 = arith.constant 0 : index
    %c0_4 = arith.constant 0 : index
    %3 = vector.load %arg3[%c0_3, %c0_4] : memref<1x128xf32, #tpu.memory_space<vmem>>, vector<1x128xf32>
    %4 = vector.broadcast %3 : vector<1x128xf32> to vector<8x128xf32>
    %5 = arith.addf %2, %4 : vector<8x128xf32>
    %cst_5 = arith.constant 0.000000e+00 : f32
    %6 = vector.broadcast %cst_5 : f32 to vector<8x128xf32>
    %7 = arith.maximumf %5, %6 : vector<8x128xf32>
    %8 = arith.truncf %7 : vector<8x128xf32> to vector<8x128xbf16>
    %c0_6 = arith.constant 0 : index
    %c0_7 = arith.constant 0 : index
    %9 = vector.load %arg4[%c0_6, %c0_7] : memref<128x128xbf16, #tpu.memory_space<vmem>>, vector<128x128xbf16>
    %cst_8 = arith.constant dense<0.000000e+00> : vector<8x128xf32>
    %10 = tpu.matmul %8, %9, %cst_8 {dimension_numbers = #tpu.dot_dimension_numbers<[1], [0], [0], [1], [0, 0, 1, 1], [], []>} : vector<8x128xbf16>, vector<128x128xbf16>, vector<8x128xf32> -> vector<8x128xf32>
    %c0_9 = arith.constant 0 : index
    %c0_10 = arith.constant 0 : index
    %11 = vector.load %arg5[%c0_9, %c0_10] : memref<1x128xf32, #tpu.memory_space<vmem>>, vector<1x128xf32>
    %12 = vector.broadcast %11 : vector<1x128xf32> to vector<8x128xf32>
    %13 = arith.addf %10, %12 : vector<8x128xf32>
    %cst_11 = arith.constant 0.000000e+00 : f32
    %14 = vector.broadcast %cst_11 : f32 to vector<8x128xf32>
    %15 = arith.maximumf %13, %14 : vector<8x128xf32>
    %16 = arith.truncf %15 : vector<8x128xf32> to vector<8x128xbf16>
    %c0_12 = arith.constant 0 : index
    %c0_13 = arith.constant 0 : index
    %17 = vector.load %arg6[%c0_12, %c0_13] : memref<128x128xbf16, #tpu.memory_space<vmem>>, vector<128x128xbf16>
    %cst_14 = arith.constant dense<0.000000e+00> : vector<8x128xf32>
    %18 = tpu.matmul %16, %17, %cst_14 {dimension_numbers = #tpu.dot_dimension_numbers<[1], [0], [0], [1], [0, 0, 1, 1], [], []>} : vector<8x128xbf16>, vector<128x128xbf16>, vector<8x128xf32> -> vector<8x128xf32>
    %c0_15 = arith.constant 0 : index
    %c0_16 = arith.constant 0 : index
    %19 = vector.load %arg7[%c0_15, %c0_16] : memref<1x128xf32, #tpu.memory_space<vmem>>, vector<1x128xf32>
    %20 = vector.broadcast %19 : vector<1x128xf32> to vector<8x128xf32>
    %21 = arith.addf %18, %20 : vector<8x128xf32>
    %c0_17 = arith.constant 0 : index
    %c0_18 = arith.constant 0 : index
    %22 = vector.load %arg8[%c0_17, %c0_18] : memref<1x128xf32, #tpu.memory_space<vmem>>, vector<1x128xf32>
    %23 = vector.broadcast %22 : vector<1x128xf32> to vector<8x128xf32>
    %24 = arith.addf %21, %23 : vector<8x128xf32>
    %cst_19 = arith.constant dense<0xFF800000> : vector<8xf32>
    %25 = vector.multi_reduction <maximumf>, %24, %cst_19 [1] : vector<8x128xf32> to vector<8xf32>
    %26 = vector.shape_cast %25 : vector<8xf32> to vector<8x1xf32>
    %27 = vector.broadcast %26 : vector<8x1xf32> to vector<8x128xf32>
    %28 = arith.subf %24, %27 : vector<8x128xf32>
    %29 = math.exp %28 : vector<8x128xf32>
    %cst_20 = arith.constant dense<0.000000e+00> : vector<8xf32>
    %30 = vector.multi_reduction <add>, %29, %cst_20 [1] : vector<8x128xf32> to vector<8xf32>
    %31 = vector.shape_cast %30 : vector<8xf32> to vector<8x1xf32>
    %32 = tpu.reciprocal %31 {approx = true} : vector<8x1xf32> -> vector<8x1xf32>
    %33 = vector.broadcast %32 : vector<8x1xf32> to vector<8x128xf32>
    %34 = arith.mulf %29, %33 : vector<8x128xf32>
    %c0_21 = arith.constant 0 : index
    %c0_22 = arith.constant 0 : index
    %35 = vector.load %arg9[%c0_21, %c0_22] : memref<1x128xf32, #tpu.memory_space<vmem>>, vector<1x128xf32>
    %36 = vector.broadcast %35 : vector<1x128xf32> to vector<8x128xf32>
    %37 = arith.mulf %21, %36 : vector<8x128xf32>
    %38 = arith.addf %34, %37 : vector<8x128xf32>
    %c0_23 = arith.constant 0 : index
    %c0_24 = arith.constant 0 : index
    %39 = vector.load %arg10[%c0_23, %c0_24] : memref<8x128xf32, #tpu.memory_space<vmem>>, vector<8x128xf32>
    tpu.vector_store %arg10[%c0_23, %c0_24], %38 {strides = array<i32>} : memref<8x128xf32, #tpu.memory_space<vmem>>, vector<8x128xf32>,
    return
  }
  func.func @transform_0(%arg0: i32) -> (i32, i32) {
    %c0_i32 = arith.constant 0 : i32
    %c0_i32_0 = arith.constant 0 : i32
    return %arg0, %c0_i32 : i32, i32
  }
  func.func @transform_1(%arg0: i32) -> (i32, i32) {
    %c0_i32 = arith.constant 0 : i32
    %c0_i32_0 = arith.constant 0 : i32
    %c0_i32_1 = arith.constant 0 : i32
    return %c0_i32, %c0_i32_0 : i32, i32
  }
  func.func @transform_2(%arg0: i32) -> (i32, i32) {
    %c0_i32 = arith.constant 0 : i32
    %c0_i32_0 = arith.constant 0 : i32
    %c0_i32_1 = arith.constant 0 : i32
    return %c0_i32, %c0_i32_0 : i32, i32
  }
  func.func @transform_3(%arg0: i32) -> (i32, i32) {
    %c0_i32 = arith.constant 0 : i32
    %c0_i32_0 = arith.constant 0 : i32
    %c0_i32_1 = arith.constant 0 : i32
    return %c0_i32, %c0_i32_0 : i32, i32
  }
  func.func @transform_4(%arg0: i32) -> (i32, i32) {
    %c0_i32 = arith.constant 0 : i32
    %c0_i32_0 = arith.constant 0 : i32
    %c0_i32_1 = arith.constant 0 : i32
    return %c0_i32, %c0_i32_0 : i32, i32
  }
  func.func @transform_5(%arg0: i32) -> (i32, i32) {
    %c0_i32 = arith.constant 0 : i32
    %c0_i32_0 = arith.constant 0 : i32
    %c0_i32_1 = arith.constant 0 : i32
    return %c0_i32, %c0_i32_0 : i32, i32
  }
  func.func @transform_6(%arg0: i32) -> (i32, i32) {
    %c0_i32 = arith.constant 0 : i32
    %c0_i32_0 = arith.constant 0 : i32
    %c0_i32_1 = arith.constant 0 : i32
    return %c0_i32, %c0_i32_0 : i32, i32
  }
  func.func @transform_7(%arg0: i32) -> (i32, i32) {
    %c0_i32 = arith.constant 0 : i32
    %c0_i32_0 = arith.constant 0 : i32
    %c0_i32_1 = arith.constant 0 : i32
    return %c0_i32, %c0_i32_0 : i32, i32
  }
  func.func @transform_8(%arg0: i32) -> (i32, i32) {
    %c0_i32 = arith.constant 0 : i32
    %c0_i32_0 = arith.constant 0 : i32
    %c0_i32_1 = arith.constant 0 : i32
    return %c0_i32, %c0_i32_0 : i32, i32
  }
  func.func @transform_9(%arg0: i32) -> (i32, i32) {
    %c0_i32 = arith.constant 0 : i32
    %c0_i32_0 = arith.constant 0 : i32
    return %arg0, %c0_i32 : i32, i32
  }
}

</mosaic_0001>

<llo_original>
// kernel: tpu_custom_call.1
$region0: #{tpu_custom_call.1}
  #allocation0 [shape = 'u32[]', space=smem, size = 0x4, offset = 0x4, fixed_abs, tag = 'smem constant byte address 0x4 - core index']
  #allocation1 [shape = 'u32[144,128]{1,0:T(1,128)}', space=vmem, size = 0x12000, scoped, tag = 'internal scratch']
  %s0 = inlined_call_operand.hbm [shape: bf16[8,16], index: 0, kind: input, shape index: {}]
  %s1 = inlined_call_operand.hbm [shape: bf16[16,128], index: 1, kind: input, shape index: {}]
  %s2 = inlined_call_operand.vmem [shape: f32[1,128], index: 2, kind: input, shape index: {}]
  %s3 = inlined_call_operand.hbm [shape: bf16[128,128], index: 3, kind: input, shape index: {}]
  %s4 = inlined_call_operand.vmem [shape: f32[1,128], index: 4, kind: input, shape index: {}]
  %s5 = inlined_call_operand.hbm [shape: bf16[128,128], index: 5, kind: input, shape index: {}]
  %s6 = inlined_call_operand.vmem [shape: f32[1,128], index: 6, kind: input, shape index: {}]
  %s7 = inlined_call_operand.vmem [shape: f32[1,128], index: 7, kind: input, shape index: {}]
  %s8 = inlined_call_operand.vmem [shape: f32[1,128], index: 8, kind: input, shape index: {}]
  %s9 = inlined_call_operand.hbm [shape: f32[8,128], index: 9, kind: output, shape index: {}]
  %s10 = sld [smem:[#allocation0]]
  $region62: #{tpu_custom_call.1} parent=0
    _
  %s12 = ssub.s32 1, %s10
  %s13 = scalar_select 0, %s12, %s10
  $region1: #{tpu_custom_call.1} parent=0
    #allocation2 [shape = 'u8[2048]{0}', space=vmem, size = 0x800, scoped, tag = 'input window, operand 0, single buffered']
    #allocation3 [shape = 's32[1]{0}', space=sflag, size = 0x4, scoped, tag = 'scoped memory for tpu_custom_call.1']
    #allocation4 [shape = 's32[1]{0}', space=sflag, size = 0x4, scoped, tag = 'scoped memory for tpu_custom_call.1']
    #allocation5 [shape = 'u8[4096]{0}', space=vmem, size = 0x1000, scoped, tag = 'input window, operand 1, single buffered']
    #allocation6 [shape = 's32[1]{0}', space=sflag, size = 0x4, scoped, tag = 'scoped memory for tpu_custom_call.1']
    #allocation7 [shape = 'u8[32768]{0}', space=vmem, size = 0x8000, scoped, tag = 'input window, operand 3, single buffered']
    #allocation8 [shape = 'u8[32768]{0}', space=vmem, size = 0x8000, scoped, tag = 'input window, operand 5, single buffered']
    #allocation9 [shape = 's32[1]{0}', space=sflag, size = 0x4, scoped, tag = 'scoped memory for tpu_custom_call.1']
    #allocation10 [shape = 'u8[4096]{0}', space=vmem, size = 0x1000, scoped, tag = 'output window, operand 0, single buffered']
    %14 = vsyncpa [#allocation3], 0
    %15 = vsyncpa [#allocation6], 0
    %16 = vsyncpa [#allocation9], 0
    %17 = vsyncpa [#allocation4], 0
    // Predicated region
    $region2: #{tpu_custom_call.1} parent=1 // pred_check
      _
    $region3: #{tpu_custom_call.1} parent=1 // pred_check_branch
      %19 = sbr.rel (0) target = $region5
    $region4: #{tpu_custom_call.1} parent=1 // pred_region
      %s21 = ssub.s32 64, 64
      %22 = vsyncadd [#allocation3], %s21
      %s24 = sshll.u32 [#allocation2], 4
      %s25 = int_to_ptr.vmem [resolvable:$true] %s24
      %27 = dma.hbm_to_vmem [thread:$0]  %s0, 64, %s25, [#allocation3]
    $region5: #{tpu_custom_call.1} parent=1 // pred_fallthru
      _
    // Predicated region
    $region6: #{tpu_custom_call.1} parent=1 // pred_check
      _
    $region7: #{tpu_custom_call.1} parent=1 // pred_check_branch
      %29 = sbr.rel (0) target = $region9
    $region8: #{tpu_custom_call.1} parent=1 // pred_region
      %s31 = ssub.s32 128, 128
      %32 = vsyncadd [#allocation6], %s31
      %s33 = sshll.u32 [#allocation5], 4
      %s34 = int_to_ptr.vmem [resolvable:$true] %s33
      %39 = dma.hbm_to_vmem [thread:$0]  %s1, 128, %s34, [#allocation6], 64, 64, 4
    $region9: #{tpu_custom_call.1} parent=1 // pred_fallthru
      _
    // Predicated region
    $region10: #{tpu_custom_call.1} parent=1 // pred_check
      _
    $region11: #{tpu_custom_call.1} parent=1 // pred_check_branch
      %41 = sbr.rel (0) target = $region13
    $region12: #{tpu_custom_call.1} parent=1 // pred_region
      _
    $region13: #{tpu_custom_call.1} parent=1 // pred_fallthru
      _
    // Predicated region
    $region14: #{tpu_custom_call.1} parent=1 // pred_check
      _
    $region15: #{tpu_custom_call.1} parent=1 // pred_check_branch
      %43 = sbr.rel (0) target = $region17
    $region16: #{tpu_custom_call.1} parent=1 // pred_region
      %s45 = ssub.s32 1024, 1024
      %46 = vsyncadd [#allocation6], %s45
      %s47 = sshll.u32 [#allocation7], 4
      %s48 = int_to_ptr.vmem [resolvable:$true] %s47
      %53 = dma.hbm_to_vmem [thread:$0]  %s3, 1024, %s48, [#allocation6], 64, 64, 4
    $region17: #{tpu_custom_call.1} parent=1 // pred_fallthru
      _
    // Predicated region
    $region18: #{tpu_custom_call.1} parent=1 // pred_check
      _
    $region19: #{tpu_custom_call.1} parent=1 // pred_check_branch
      %55 = sbr.rel (0) target = $region21
    $region20: #{tpu_custom_call.1} parent=1 // pred_region
      _
    $region21: #{tpu_custom_call.1} parent=1 // pred_fallthru
      _
    // Predicated region
    $region22: #{tpu_custom_call.1} parent=1 // pred_check
      _
    $region23: #{tpu_custom_call.1} parent=1 // pred_check_branch
      %57 = sbr.rel (0) target = $region25
    $region24: #{tpu_custom_call.1} parent=1 // pred_region
      %s59 = ssub.s32 1024, 1024
      %60 = vsyncadd [#allocation9], %s59
      %s61 = sshll.u32 [#allocation8], 4
      %s62 = int_to_ptr.vmem [resolvable:$true] %s61
      %67 = dma.hbm_to_vmem [thread:$0]  %s5, 1024, %s62, [#allocation9], 64, 64, 4
    $region25: #{tpu_custom_call.1} parent=1 // pred_fallthru
      _
    // Predicated region
    $region26: #{tpu_custom_call.1} parent=1 // pred_check
      _
    $region27: #{tpu_custom_call.1} parent=1 // pred_check_branch
      %69 = sbr.rel (0) target = $region29
    $region28: #{tpu_custom_call.1} parent=1 // pred_region
      _
    $region29: #{tpu_custom_call.1} parent=1 // pred_fallthru
      _
    // Predicated region
    $region30: #{tpu_custom_call.1} parent=1 // pred_check
      _
    $region31: #{tpu_custom_call.1} parent=1 // pred_check_branch
      %71 = sbr.rel (0) target = $region33
    $region32: #{tpu_custom_call.1} parent=1 // pred_region
      _
    $region33: #{tpu_custom_call.1} parent=1 // pred_fallthru
      _
    // Predicated region
    $region34: #{tpu_custom_call.1} parent=1 // pred_check
      _
    $region35: #{tpu_custom_call.1} parent=1 // pred_check_branch
      %73 = sbr.rel (0) target = $region37
    $region36: #{tpu_custom_call.1} parent=1 // pred_region
      _
    $region37: #{tpu_custom_call.1} parent=1 // pred_fallthru
      _
    // Predicated region
    $region38: #{tpu_custom_call.1} parent=1 // pred_check
      _
    $region39: #{tpu_custom_call.1} parent=1 // pred_check_branch
      %75 = sbr.rel (0) target = $region41
    $region40: #{tpu_custom_call.1} parent=1 // pred_region
      %76 = dma.done [#allocation3], 64
    $region41: #{tpu_custom_call.1} parent=1 // pred_fallthru
      _
    // Predicated region
    $region42: #{tpu_custom_call.1} parent=1 // pred_check
      _
    $region43: #{tpu_custom_call.1} parent=1 // pred_check_branch
      %78 = sbr.rel (0) target = $region45
    $region44: #{tpu_custom_call.1} parent=1 // pred_region
      %79 = dma.done [#allocation6], 128
    $region45: #{tpu_custom_call.1} parent=1 // pred_fallthru
      _
    // Predicated region
    $region46: #{tpu_custom_call.1} parent=1 // pred_check
      _
    $region47: #{tpu_custom_call.1} parent=1 // pred_check_branch
      %81 = sbr.rel (0) target = $region49
    $region48: #{tpu_custom_call.1} parent=1 // pred_region
      %82 = dma.done [#allocation6], 1024
    $region49: #{tpu_custom_call.1} parent=1 // pred_fallthru
      _
    // Predicated region
    $region50: #{tpu_custom_call.1} parent=1 // pred_check
      _
    $region51: #{tpu_custom_call.1} parent=1 // pred_check_branch
      %84 = sbr.rel (0) target = $region53
    $region52: #{tpu_custom_call.1} parent=1 // pred_region
      %85 = dma.done [#allocation9], 1024
    $region53: #{tpu_custom_call.1} parent=1 // pred_fallthru
      _
    %v87 = vld [vmem:[#allocation2] sm:$0xf]
    %v88 = vld [vmem:[#allocation5] sm:$0xf]
    %v89 = vld [vmem:[#allocation5 + $0x4] sm:$0xf]
    %v90 = vld [vmem:[%s2] sm:$0x1]
    %v92 = vlaneseq
    %v93 = vshrl.u32 %v92, 7
    %v94 = vsub.s32 0, %v93
    %v95 = vrot.slane %v90, %v94
    %v99 = vunpack.c.l.b16 %v88
    %v100 = vunpack.c.l.b16 %v89
    %v101 = vpack.c.b16 %v100, %v99
    %vm103 = vcmask 130048
    %v105 = vsel %vm103, %v87, 0
    %107 = vmatprep.subr.bf16.mxu0 0
    %108 = vmatpush1.bf16.msra.mxu0 0
    %109 = vmatprep.subr.bf16.mxu0 0
    %110 = vmatpush1.bf16.msra.mxu0 0
    %111 = vmatprep.subr.bf16.mxu0 0
    %112 = vmatpush1.bf16.msra.mxu0 0
    %113 = vmatprep.subr.bf16.mxu0 0
    %114 = vmatpush1.bf16.msra.mxu0 0
    %115 = vmatprep.subr.bf16.mxu0 0
    %116 = vmatpush1.bf16.msra.mxu0 0
    %117 = vmatprep.subr.bf16.mxu0 0
    %118 = vmatpush1.bf16.msra.mxu0 0
    %119 = vmatprep.subr.bf16.mxu0 0
    %120 = vmatpush1.bf16.msra.mxu0 0
    %121 = vmatprep.subr.bf16.mxu0 0
    %122 = vmatpush1.bf16.msra.mxu0 %v101
    %123 = vmatprep.subr.bf16.mxu0 0
    %124 = vmatpush2.bf16.msra.mxu0 0
    %125 = vmatprep.subr.bf16.mxu0 0
    %126 = vmatpush2.bf16.msra.mxu0 0
    %127 = vmatprep.subr.bf16.mxu0 0
    %128 = vmatpush2.bf16.msra.mxu0 0
    %129 = vmatprep.subr.bf16.mxu0 0
    %130 = vmatpush2.bf16.msra.mxu0 0
    %131 = vmatprep.subr.bf16.mxu0 0
    %132 = vmatpush2.bf16.msra.mxu0 0
    %133 = vmatprep.subr.bf16.mxu0 0
    %134 = vmatpush2.bf16.msra.mxu0 0
    %135 = vmatprep.subr.bf16.mxu0 0
    %136 = vmatpush2.bf16.msra.mxu0 0
    %137 = vmatprep.subr.bf16.mxu0 0
    %138 = vmatpush2.bf16.msra.mxu0 0
    %139 = vmatprep.mubr.bf16.mxu0 0
    %140 = vmatmul.mubr.bf16.gmra.mxu0 %v105
    %v141 = vpop.f32.mrf.mxu0
    %v142 = vadd.f32 %v95, %v141
    %v143 = vpop.f32.mrf.mxu0
    %v144 = vpop.f32.mrf.mxu0
    %v145 = vpop.f32.mrf.mxu0
    %146 = vdwg.mxu0
    %v147 = vmax.f32 %v142, 0.0
    %v148 = vpack.c.bf16 %v147, %v147
    %v149 = vld [vmem:[#allocation7] sm:$0xf]
    %v150 = vld [vmem:[#allocation7 + $0x4] sm:$0xf]
    %v151 = vld [vmem:[#allocation7 + $0x8] sm:$0xf]
    %v152 = vld [vmem:[#allocation7 + $0xc] sm:$0xf]
    %v153 = vld [vmem:[#allocation7 + $0x10] sm:$0xf]
    %v154 = vld [vmem:[#allocation7 + $0x14] sm:$0xf]
    %v155 = vld [vmem:[#allocation7 + $0x18] sm:$0xf]
    %v156 = vld [vmem:[#allocation7 + $0x1c] sm:$0xf]
    %v157 = vld [vmem:[#allocation7 + $0x20] sm:$0xf]
    %v158 = vld [vmem:[#allocation7 + $0x24] sm:$0xf]
    %v159 = vld [vmem:[#allocation7 + $0x28] sm:$0xf]
    %v160 = vld [vmem:[#allocation7 + $0x2c] sm:$0xf]
    %v161 = vld [vmem:[#allocation7 + $0x30] sm:$0xf]
    %v162 = vld [vmem:[#allocation7 + $0x34] sm:$0xf]
    %v163 = vld [vmem:[#allocation7 + $0x38] sm:$0xf]
    %v164 = vld [vmem:[#allocation7 + $0x3c] sm:$0xf]
    %v165 = vld [vmem:[%s4] sm:$0x1]
    %v167 = vlaneseq
    %v168 = vshrl.u32 %v167, 7
    %v169 = vsub.s32 0, %v168
    %v170 = vrot.slane %v165, %v169
    %v188 = vunpack.c.l.b16 %v149
    %v189 = vunpack.c.l.b16 %v150
    %v190 = vunpack.c.l.b16 %v151
    %v191 = vunpack.c.l.b16 %v152
    %v192 = vunpack.c.l.b16 %v153
    %v193 = vunpack.c.l.b16 %v154
    %v194 = vunpack.c.l.b16 %v155
    %v195 = vunpack.c.l.b16 %v156
    %v196 = vunpack.c.l.b16 %v157
    %v197 = vunpack.c.l.b16 %v158
    %v198 = vunpack.c.l.b16 %v159
    %v199 = vunpack.c.l.b16 %v160
    %v200 = vunpack.c.l.b16 %v161
    %v201 = vunpack.c.l.b16 %v162
    %v202 = vunpack.c.l.b16 %v163
    %v203 = vunpack.c.l.b16 %v164
    %v204 = vpack.c.b16 %v189, %v188
    %v205 = vpack.c.b16 %v191, %v190
    %v206 = vpack.c.b16 %v193, %v192
    %v207 = vpack.c.b16 %v195, %v194
    %v208 = vpack.c.b16 %v197, %v196
    %v209 = vpack.c.b16 %v199, %v198
    %v210 = vpack.c.b16 %v201, %v200
    %v211 = vpack.c.b16 %v203, %v202
    %220 = vmatprep.subr.bf16.mxu0 0
    %221 = vmatpush1.bf16.msra.mxu0 %v211
    %222 = vmatprep.subr.bf16.mxu0 0
    %223 = vmatpush1.bf16.msra.mxu0 %v210
    %224 = vmatprep.subr.bf16.mxu0 0
    %225 = vmatpush1.bf16.msra.mxu0 %v209
    %226 = vmatprep.subr.bf16.mxu0 0
    %227 = vmatpush1.bf16.msra.mxu0 %v208
    %228 = vmatprep.subr.bf16.mxu0 0
    %229 = vmatpush1.bf16.msra.mxu0 %v207
    %230 = vmatprep.subr.bf16.mxu0 0
    %231 = vmatpush1.bf16.msra.mxu0 %v206
    %232 = vmatprep.subr.bf16.mxu0 0
    %233 = vmatpush1.bf16.msra.mxu0 %v205
    %234 = vmatprep.subr.bf16.mxu0 0
    %235 = vmatpush1.bf16.msra.mxu0 %v204
    %236 = vmatprep.subr.bf16.mxu0 0
    %237 = vmatpush2.bf16.msra.mxu0 0
    %238 = vmatprep.subr.bf16.mxu0 0
    %239 = vmatpush2.bf16.msra.mxu0 0
    %240 = vmatprep.subr.bf16.mxu0 0
    %241 = vmatpush2.bf16.msra.mxu0 0
    %242 = vmatprep.subr.bf16.mxu0 0
    %243 = vmatpush2.bf16.msra.mxu0 0
    %244 = vmatprep.subr.bf16.mxu0 0
    %245 = vmatpush2.bf16.msra.mxu0 0
    %246 = vmatprep.subr.bf16.mxu0 0
    %247 = vmatpush2.bf16.msra.mxu0 0
    %248 = vmatprep.subr.bf16.mxu0 0
    %249 = vmatpush2.bf16.msra.mxu0 0
    %250 = vmatprep.subr.bf16.mxu0 0
    %251 = vmatpush2.bf16.msra.mxu0 0
    %252 = vmatprep.mubr.bf16.mxu0 0
    %253 = vmatmul.mubr.bf16.gmra.mxu0 %v148
    %v254 = vpop.f32.mrf.mxu0
    %v255 = vadd.f32 %v170, %v254
    %v256 = vpop.f32.mrf.mxu0
    %v257 = vpop.f32.mrf.mxu0
    %v258 = vpop.f32.mrf.mxu0
    %259 = vdwg.mxu0
    %v260 = vmax.f32 %v255, 0.0
    %v261 = vpack.c.bf16 %v260, %v260
    %v262 = vld [vmem:[#allocation8] sm:$0xf]
    %v263 = vld [vmem:[#allocation8 + $0x4] sm:$0xf]
    %v264 = vld [vmem:[#allocation8 + $0x8] sm:$0xf]
    %v265 = vld [vmem:[#allocation8 + $0xc] sm:$0xf]
    %v266 = vld [vmem:[#allocation8 + $0x10] sm:$0xf]
    %v267 = vld [vmem:[#allocation8 + $0x14] sm:$0xf]
    %v268 = vld [vmem:[#allocation8 + $0x18] sm:$0xf]
    %v269 = vld [vmem:[#allocation8 + $0x1c] sm:$0xf]
    %v270 = vld [vmem:[#allocation8 + $0x20] sm:$0xf]
    %v271 = vld [vmem:[#allocation8 + $0x24] sm:$0xf]
    %v272 = vld [vmem:[#allocation8 + $0x28] sm:$0xf]
    %v273 = vld [vmem:[#allocation8 + $0x2c] sm:$0xf]
    %v274 = vld [vmem:[#allocation8 + $0x30] sm:$0xf]
    %v275 = vld [vmem:[#allocation8 + $0x34] sm:$0xf]
    %v276 = vld [vmem:[#allocation8 + $0x38] sm:$0xf]
    %v277 = vld [vmem:[#allocation8 + $0x3c] sm:$0xf]
    %v278 = vld [vmem:[%s6] sm:$0x1]
    %v280 = vlaneseq
    %v281 = vshrl.u32 %v280, 7
    %v282 = vsub.s32 0, %v281
    %v283 = vrot.slane %v278, %v282
    %v301 = vunpack.c.l.b16 %v262
    %v302 = vunpack.c.l.b16 %v263
    %v303 = vunpack.c.l.b16 %v264
    %v304 = vunpack.c.l.b16 %v265
    %v305 = vunpack.c.l.b16 %v266
    %v306 = vunpack.c.l.b16 %v267
    %v307 = vunpack.c.l.b16 %v268
    %v308 = vunpack.c.l.b16 %v269
    %v309 = vunpack.c.l.b16 %v270
    %v310 = vunpack.c.l.b16 %v271
    %v311 = vunpack.c.l.b16 %v272
    %v312 = vunpack.c.l.b16 %v273
    %v313 = vunpack.c.l.b16 %v274
    %v314 = vunpack.c.l.b16 %v275
    %v315 = vunpack.c.l.b16 %v276
    %v316 = vunpack.c.l.b16 %v277
    %v317 = vpack.c.b16 %v302, %v301
    %v318 = vpack.c.b16 %v304, %v303
    %v319 = vpack.c.b16 %v306, %v305
    %v320 = vpack.c.b16 %v308, %v307
    %v321 = vpack.c.b16 %v310, %v309
    %v322 = vpack.c.b16 %v312, %v311
    %v323 = vpack.c.b16 %v314, %v313
    %v324 = vpack.c.b16 %v316, %v315
    %333 = vmatprep.subr.bf16.mxu0 0
    %334 = vmatpush1.bf16.msra.mxu0 %v324
    %335 = vmatprep.subr.bf16.mxu0 0
    %336 = vmatpush1.bf16.msra.mxu0 %v323
    %337 = vmatprep.subr.bf16.mxu0 0
    %338 = vmatpush1.bf16.msra.mxu0 %v322
    %339 = vmatprep.subr.bf16.mxu0 0
    %340 = vmatpush1.bf16.msra.mxu0 %v321
    %341 = vmatprep.subr.bf16.mxu0 0
    %342 = vmatpush1.bf16.msra.mxu0 %v320
    %343 = vmatprep.subr.bf16.mxu0 0
    %344 = vmatpush1.bf16.msra.mxu0 %v319
    %345 = vmatprep.subr.bf16.mxu0 0
    %346 = vmatpush1.bf16.msra.mxu0 %v318
    %347 = vmatprep.subr.bf16.mxu0 0
    %348 = vmatpush1.bf16.msra.mxu0 %v317
    %349 = vmatprep.subr.bf16.mxu0 0
    %350 = vmatpush2.bf16.msra.mxu0 0
    %351 = vmatprep.subr.bf16.mxu0 0
    %352 = vmatpush2.bf16.msra.mxu0 0
    %353 = vmatprep.subr.bf16.mxu0 0
    %354 = vmatpush2.bf16.msra.mxu0 0
    %355 = vmatprep.subr.bf16.mxu0 0
    %356 = vmatpush2.bf16.msra.mxu0 0
    %357 = vmatprep.subr.bf16.mxu0 0
    %358 = vmatpush2.bf16.msra.mxu0 0
    %359 = vmatprep.subr.bf16.mxu0 0
    %360 = vmatpush2.bf16.msra.mxu0 0
    %361 = vmatprep.subr.bf16.mxu0 0
    %362 = vmatpush2.bf16.msra.mxu0 0
    %363 = vmatprep.subr.bf16.mxu0 0
    %364 = vmatpush2.bf16.msra.mxu0 0
    %365 = vmatprep.mubr.bf16.mxu0 0
    %366 = vmatmul.mubr.bf16.gmra.mxu0 %v261
    %v367 = vpop.f32.mrf.mxu0
    %v368 = vadd.f32 %v283, %v367
    %v369 = vpop.f32.mrf.mxu0
    %v370 = vpop.f32.mrf.mxu0
    %v371 = vpop.f32.mrf.mxu0
    %372 = vdwg.mxu0
    %v373 = vld [vmem:[%s7] sm:$0x1]
    %v375 = vlaneseq
    %v376 = vshrl.u32 %v375, 7
    %v377 = vsub.s32 0, %v376
    %v378 = vrot.slane %v373, %v377
    %v380 = vadd.f32 %v368, %v378
    %381 = vmax.xlane.f32.xlu0 %v380
    %v382 = vpop.xlane.xlu0 %381
    %v383 = vsub.f32 %v380, %v382
    %v384 = vmul.f32 %v383, 1.442695
    %v385 = vpow.pop %v384
    %386 = vadd.xlane.f32.xlu0 %v385
    %v387 = vpop.xlane.xlu0 %386
    %v388 = vrcp.pop %v387
    %v389 = vmul.f32 %v385, %v388
    %v390 = vld [vmem:[%s8] sm:$0x1]
    %v392 = vlaneseq
    %v393 = vshrl.u32 %v392, 7
    %v394 = vsub.s32 0, %v393
    %v395 = vrot.slane %v390, %v394
    %v397 = vmul.f32 %v368, %v395
    %v398 = vadd.f32 %v389, %v397
    %399 = vst [vmem:[#allocation10] sm:$0xff] %v398
    // Predicated region
    $region54: #{tpu_custom_call.1} parent=1 // pred_check
      _
    $region55: #{tpu_custom_call.1} parent=1 // pred_check_branch
      %401 = sbr.rel (0) target = $region57
    $region56: #{tpu_custom_call.1} parent=1 // pred_region
      %s403 = ssub.s32 128, 128
      %404 = vsyncadd [#allocation4], %s403
      %s406 = sshll.u32 [#allocation10], 4
      %s407 = int_to_ptr.vmem [resolvable:$true] %s406
      %409 = dma.vmem_to_hbm [thread:$0]  %s407, 128, %s9, [#allocation4]
    $region57: #{tpu_custom_call.1} parent=1 // pred_fallthru
      _
    // Predicated region
    $region58: #{tpu_custom_call.1} parent=1 // pred_check
      _
    $region59: #{tpu_custom_call.1} parent=1 // pred_check_branch
      %411 = sbr.rel (0) target = $region61
    $region60: #{tpu_custom_call.1} parent=1 // pred_region
      %412 = dma.done [#allocation4], 128
    $region61: #{tpu_custom_call.1} parent=1 // pred_fallthru
      _
    %413 = vsyncpa [#allocation3], 1
    %414 = vsyncpa [#allocation6], 1
    %415 = vsyncpa [#allocation9], 1
    %416 = vsyncpa [#allocation4], 1

</llo_original>
